<compile_context>
chip_gen: v6e
topology: v6e:2x2x1
jax: 0.10.0
libtpu: 0.0.40
codegen_flags: <defaults>
</compile_context>

<pallas_src>
import math

import jax
import jax.numpy as jnp
from jax import lax
from jax.experimental import pallas as pl
from jax.experimental.pallas import tpu as pltpu


def _round_up(n, m):
    return ((n + m - 1) // m) * m


def _contract(x, w):
    # x: [M, K], w: [N, K] (PyTorch layout) -> [M, N] accumulated in f32 on the MXU.
    return lax.dot_general(
        x, w, dimension_numbers=(((1,), (1,)), ((), ())),
        preferred_element_type=jnp.float32)


def _make_abduction_kernel(n_shared, latent_dim):
    def kernel(*refs):
        # refs: x, (W, b) * n_shared, W_heads, b_heads, packed_out
        x_ref = refs[0]
        mxu_dtype = x_ref.dtype
        h = x_ref[...]
        idx = 1
        for _ in range(n_shared):
            w_ref, b_ref = refs[idx], refs[idx + 1]
            idx += 2
            acc = _contract(h, w_ref[...]) + b_ref[...]       # f32 bias add
            h = jnp.maximum(acc, 0.0).astype(mxu_dtype)       # ReLU, back to MXU dtype

        w_heads_ref, b_heads_ref = refs[idx], refs[idx + 1]
        out_ref = refs[idx + 2]

        # Single fused head contraction: columns [0, latent) = location,
        # columns [latent, 2*latent) = scale pre-activation.
        heads = _contract(h, w_heads_ref[...]) + b_heads_ref[...]       # [tm, 2*latent] f32
        # Numerically-stable softplus: max(x,0) + log1p(exp(-|x|)) (exp/log on EUP).
        sp = jnp.maximum(heads, 0.0) + jnp.log1p(jnp.exp(-jnp.abs(heads)))
        lane = lax.broadcasted_iota(jnp.int32, heads.shape, 1)
        packed = jnp.where(lane < latent_dim, heads, sp)
        out_ref[...] = packed.astype(out_ref.dtype)
    return kernel


def pack_abduction_params(shared_params, loc_params, scale_params,
                          compute_dtype=jnp.float32):
    """One-time parameter packing (hoisted out of the forward path).

    - biases reshaped to [1, out] (f32: elementwise math stays f32 for v5e),
    - loc/scale head weights+biases concatenated into one [2*latent, shared_out] head,
    - weights cast to `compute_dtype` (use jnp.bfloat16 on v6e/v7x to halve HBM traffic).
    """
    shared = [(w.astype(compute_dtype), b.astype(jnp.float32).reshape(1, -1))
              for w, b in shared_params]
    w_heads = jnp.concatenate([loc_params[0], scale_params[0]], axis=0).astype(compute_dtype)
    b_heads = jnp.concatenate([loc_params[1], scale_params[1]], axis=0)
    b_heads = b_heads.astype(jnp.float32).reshape(1, -1)
    latent_dim = int(loc_params[0].shape[0])
    return (shared, w_heads, b_heads, latent_dim)


def _batch_tile(batch):
    # Small batch: a single grid step (per-step overhead dominates; nothing to split).
    if batch <= 128:
        return batch
    # Larger batch: >= 2 grid steps so the "parallel" axis feeds both v7x
    # TensorCores; cap the tile at 512 rows (per-step-overhead sweet spot,
    # a few hundred KiB of VMEM at these widths).
    half = _round_up(-(-batch // 2), 8)
    return min(512, half)


def abduction_network_forward(representation, packed_params):
    """Pallas TPU forward of AbductionNetwork.

    Args:
      representation: [batch, representation_dim] float array.
      packed_params: result of pack_abduction_params(...).
    Returns:
      (location [batch, latent_dim], scale [batch, latent_dim]),
      scale = softplus(scale_head(shared_mlp(representation))).
    """
    shared, w_heads, b_heads, latent_dim = packed_params
    compute_dtype = w_heads.dtype

    x = representation
    if x.dtype != compute_dtype:
        # bf16 path: ideally the upstream producer already emits this dtype.
        x = x.astype(compute_dtype)

    batch, rep_dim = x.shape
    two_lat = w_heads.shape[0]
    out_dtype = jnp.float32  # heads are accumulated/activated in f32 regardless

    tm = _batch_tile(batch)
    grid = (pl.cdiv(batch, tm),)

    operands = [x]
    in_specs = [pl.BlockSpec((tm, rep_dim), lambda i: (i, 0))]

    def resident_spec(arr):
        # Same block index every grid step -> stays VMEM-resident, DMA'd once.
        return pl.BlockSpec(arr.shape, lambda i: (0, 0))

    for w, b in shared:
        operands += [w, b]
        in_specs += [resident_spec(w), resident_spec(b)]
    operands += [w_heads, b_heads]
    in_specs += [resident_spec(w_heads), resident_spec(b_heads)]

    out_specs = pl.BlockSpec((tm, two_lat), lambda i: (i, 0))
    out_shape = jax.ShapeDtypeStruct((batch, two_lat), out_dtype)

    # Advisory cost estimate so XLA schedules neighbors around this small call.
    flops = 0
    prev = rep_dim
    for w, _ in shared:
        flops += 2 * batch * prev * int(w.shape[0])
        prev = int(w.shape[0])
    flops += 2 * batch * prev * two_lat
    bytes_accessed = sum(int(a.size) * a.dtype.itemsize for a in operands)
    bytes_accessed += batch * two_lat * jnp.dtype(out_dtype).itemsize
    cost = pl.CostEstimate(flops=int(flops),
                           transcendentals=int(2 * batch * two_lat),
                           bytes_accessed=int(bytes_accessed))

    packed_out = pl.pallas_call(
        _make_abduction_kernel(len(shared), latent_dim),
        out_shape=out_shape,
        grid_spec=pltpu.PrefetchScalarGridSpec(
            num_scalar_prefetch=0,
            grid=grid,
            in_specs=in_specs,
            out_specs=out_specs,
        ),
        compiler_params=pltpu.CompilerParams(
            dimension_semantics=("parallel",),  # batch axis -> both v7x TensorCores
        ),
        cost_estimate=cost,
    )(*operands)

    # Only wrapper-side post-op: split a tiny [batch, 2*latent] array.
    return packed_out[:, :latent_dim], packed_out[:, latent_dim:]


def init_abduction_params(key, representation_dim, latent_dim, hidden_dims=(64, 32)):
    """Deterministic init matching nn.Linear's default (uniform +/- 1/sqrt(fan_in))."""
    def linear_init(k, out_dim, in_dim):
        kw, kb = jax.random.split(k)
        bound = 1.0 / math.sqrt(in_dim)
        w = jax.random.uniform(kw, (out_dim, in_dim), jnp.float32, -bound, bound)
        b = jax.random.uniform(kb, (out_dim,), jnp.float32, -bound, bound)
        return w, b

    keys = jax.random.split(key, len(hidden_dims) + 2)
    shared = []
    prev = representation_dim
    for i, h in enumerate(hidden_dims):
        shared.append(linear_init(keys[i], h, prev))
        prev = h
    loc = linear_init(keys[len(hidden_dims)], latent_dim, prev)
    scale = linear_init(keys[len(hidden_dims) + 1], latent_dim, prev)
    return shared, loc, scale


if __name__ == "__main__":
    representation_dim = 32
    latent_dim = 16
    hidden_dims = (64, 32)

    key = jax.random.PRNGKey(0)
    k_x, k_p, k_x2 = jax.random.split(key, 3)

    shared, loc_p, scale_p = init_abduction_params(
        k_p, representation_dim, latent_dim, hidden_dims)

    def reference(x):
        h = x
        for w, b in shared:
            h = jnp.maximum(h @ w.T + b[None, :], 0.0)
        loc = h @ loc_p[0].T + loc_p[1][None, :]
        scale = jnp.logaddexp(h @ scale_p[0].T + scale_p[1][None, :], 0.0)  # softplus
        return loc, scale

    # --- f32 path, small batch (single grid step) ---
    batch = 8
    x = jax.random.normal(k_x, (batch, representation_dim), jnp.float32)
    packed_f32 = pack_abduction_params(shared, loc_p, scale_p, compute_dtype=jnp.float32)
    loc, scale = jax.block_until_ready(abduction_network_forward(x, packed_f32))
    loc_ref, scale_ref = reference(x)
    assert loc.shape == (batch, latent_dim) and scale.shape == (batch, latent_dim)
    assert jnp.allclose(loc, loc_ref, atol=1e-4, rtol=1e-4)
    assert jnp.allclose(scale, scale_ref, atol=1e-4, rtol=1e-4)
    assert bool(jnp.all(scale > 0.0))

    # --- f32 path, larger ragged batch (2 grid steps, masked last block) ---
    batch2 = 300
    x2 = jax.random.normal(k_x2, (batch2, representation_dim), jnp.float32)
    loc2, scale2 = jax.block_until_ready(abduction_network_forward(x2, packed_f32))
    loc2_ref, scale2_ref = reference(x2)
    assert jnp.allclose(loc2, loc2_ref, atol=1e-4, rtol=1e-4)
    assert jnp.allclose(scale2, scale2_ref, atol=1e-4, rtol=1e-4)

    # --- bf16 MXU-operand path (v6e/v7x HBM-traffic optimization), looser tolerance ---
    packed_bf16 = pack_abduction_params(shared, loc_p, scale_p, compute_dtype=jnp.bfloat16)
    loc_bf, scale_bf = jax.block_until_ready(abduction_network_forward(x2, packed_bf16))
    assert jnp.allclose(loc_bf, loc2_ref, atol=1e-1, rtol=1e-1)
    assert jnp.allclose(scale_bf, scale2_ref, atol=1e-1, rtol=1e-1)

    print("KERNEL_OK")
</pallas_src>

<mosaic_0001>
module attributes {stable_mosaic.version = 11 : i64} {
  func.func @kernel(%arg0: i32, %arg1: memref<8x32xf32, #tpu.memory_space<vmem>>, %arg2: memref<64x32xf32, #tpu.memory_space<vmem>>, %arg3: memref<1x64xf32, #tpu.memory_space<vmem>>, %arg4: memref<32x64xf32, #tpu.memory_space<vmem>>, %arg5: memref<1x32xf32, #tpu.memory_space<vmem>>, %arg6: memref<32x32xf32, #tpu.memory_space<vmem>>, %arg7: memref<1x32xf32, #tpu.memory_space<vmem>>, %arg8: memref<8x32xf32, #tpu.memory_space<vmem>>) attributes {dimension_semantics = [#tpu.dimension_semantics<parallel>], iteration_bounds = array<i64: 1>, scalar_prefetch = 0 : i64, scratch_operands = 0 : i64, tpu.core_type = #tpu.core_type<tc>, window_params = [{transform_indices = @transform_0, window_bounds = array<i64: 8, 32>}, {pipeline_mode = #tpu.pipeline_mode<synchronous>, transform_indices = @transform_1, window_bounds = array<i64: 64, 32>}, {pipeline_mode = #tpu.pipeline_mode<synchronous>, transform_indices = @transform_2, window_bounds = array<i64: 1, 64>}, {pipeline_mode = #tpu.pipeline_mode<synchronous>, transform_indices = @transform_3, window_bounds = array<i64: 32, 64>}, {pipeline_mode = #tpu.pipeline_mode<synchronous>, transform_indices = @transform_4, window_bounds = array<i64: 1, 32>}, {pipeline_mode = #tpu.pipeline_mode<synchronous>, transform_indices = @transform_5, window_bounds = array<i64: 32, 32>}, {pipeline_mode = #tpu.pipeline_mode<synchronous>, transform_indices = @transform_6, window_bounds = array<i64: 1, 32>}, {transform_indices = @transform_7, window_bounds = array<i64: 8, 32>}]} {
    %c0 = arith.constant 0 : index
    %c0_0 = arith.constant 0 : index
    %0 = vector.load %arg1[%c0, %c0_0] : memref<8x32xf32, #tpu.memory_space<vmem>>, vector<8x32xf32>
    %c0_1 = arith.constant 0 : index
    %c0_2 = arith.constant 0 : index
    %1 = vector.load %arg2[%c0_1, %c0_2] : memref<64x32xf32, #tpu.memory_space<vmem>>, vector<64x32xf32>
    %cst = arith.constant dense<0.000000e+00> : vector<8x64xf32>
    %2 = tpu.matmul %0, %1, %cst {dimension_numbers = #tpu.dot_dimension_numbers<[1], [1], [0], [0], [0, 0, 1, 0], [], []>} : vector<8x32xf32>, vector<64x32xf32>, vector<8x64xf32> -> vector<8x64xf32>
    %c0_3 = arith.constant 0 : index
    %c0_4 = arith.constant 0 : index
    %3 = vector.load %arg3[%c0_3, %c0_4] : memref<1x64xf32, #tpu.memory_space<vmem>>, vector<1x64xf32>
    %4 = vector.broadcast %3 : vector<1x64xf32> to vector<8x64xf32>
    %5 = arith.addf %2, %4 : vector<8x64xf32>
    %cst_5 = arith.constant 0.000000e+00 : f32
    %6 = vector.broadcast %cst_5 : f32 to vector<8x64xf32>
    %7 = arith.maximumf %5, %6 : vector<8x64xf32>
    %c0_6 = arith.constant 0 : index
    %c0_7 = arith.constant 0 : index
    %8 = vector.load %arg4[%c0_6, %c0_7] : memref<32x64xf32, #tpu.memory_space<vmem>>, vector<32x64xf32>
    %cst_8 = arith.constant dense<0.000000e+00> : vector<8x32xf32>
    %9 = tpu.matmul %7, %8, %cst_8 {dimension_numbers = #tpu.dot_dimension_numbers<[1], [1], [0], [0], [0, 0, 1, 0], [], []>} : vector<8x64xf32>, vector<32x64xf32>, vector<8x32xf32> -> vector<8x32xf32>
    %c0_9 = arith.constant 0 : index
    %c0_10 = arith.constant 0 : index
    %10 = vector.load %arg5[%c0_9, %c0_10] : memref<1x32xf32, #tpu.memory_space<vmem>>, vector<1x32xf32>
    %11 = vector.broadcast %10 : vector<1x32xf32> to vector<8x32xf32>
    %12 = arith.addf %9, %11 : vector<8x32xf32>
    %cst_11 = arith.constant 0.000000e+00 : f32
    %13 = vector.broadcast %cst_11 : f32 to vector<8x32xf32>
    %14 = arith.maximumf %12, %13 : vector<8x32xf32>
    %c0_12 = arith.constant 0 : index
    %c0_13 = arith.constant 0 : index
    %15 = vector.load %arg6[%c0_12, %c0_13] : memref<32x32xf32, #tpu.memory_space<vmem>>, vector<32x32xf32>
    %cst_14 = arith.constant dense<0.000000e+00> : vector<8x32xf32>
    %16 = tpu.matmul %14, %15, %cst_14 {dimension_numbers = #tpu.dot_dimension_numbers<[1], [1], [0], [0], [0, 0, 1, 0], [], []>} : vector<8x32xf32>, vector<32x32xf32>, vector<8x32xf32> -> vector<8x32xf32>
    %c0_15 = arith.constant 0 : index
    %c0_16 = arith.constant 0 : index
    %17 = vector.load %arg7[%c0_15, %c0_16] : memref<1x32xf32, #tpu.memory_space<vmem>>, vector<1x32xf32>
    %18 = vector.broadcast %17 : vector<1x32xf32> to vector<8x32xf32>
    %19 = arith.addf %16, %18 : vector<8x32xf32>
    %cst_17 = arith.constant 0.000000e+00 : f32
    %20 = vector.broadcast %cst_17 : f32 to vector<8x32xf32>
    %21 = arith.maximumf %19, %20 : vector<8x32xf32>
    %22 = math.absf %19 : vector<8x32xf32>
    %cst_18 = arith.constant 0.000000e+00 : f32
    %23 = vector.broadcast %cst_18 : f32 to vector<8x32xf32>
    %24 = arith.subf %23, %22 : vector<8x32xf32>
    %25 = math.exp %24 : vector<8x32xf32>
    %26 = math.log1p %25 : vector<8x32xf32>
    %27 = arith.addf %21, %26 : vector<8x32xf32>
    %28 = tpu.iota {dimensions = array<i32: 1>} : vector<8x32xi32>
    %c16_i32 = arith.constant 16 : i32
    %29 = vector.broadcast %c16_i32 : i32 to vector<8x32xi32>
    %30 = arith.cmpi slt, %28, %29 : vector<8x32xi32>
    %31 = arith.select %30, %19, %27 : vector<8x32xi1>, vector<8x32xf32>
    %c0_19 = arith.constant 0 : index
    %c0_20 = arith.constant 0 : index
    %32 = vector.load %arg8[%c0_19, %c0_20] : memref<8x32xf32, #tpu.memory_space<vmem>>, vector<8x32xf32>
    tpu.vector_store %arg8[%c0_19, %c0_20], %31 {strides = array<i32>} : memref<8x32xf32, #tpu.memory_space<vmem>>, vector<8x32xf32>,
    return
  }
  func.func @transform_0(%arg0: i32) -> (i32, i32) {
    %c0_i32 = arith.constant 0 : i32
    %c0_i32_0 = arith.constant 0 : i32
    return %arg0, %c0_i32 : i32, i32
  }
  func.func @transform_1(%arg0: i32) -> (i32, i32) {
    %c0_i32 = arith.constant 0 : i32
    %c0_i32_0 = arith.constant 0 : i32
    %c0_i32_1 = arith.constant 0 : i32
    return %c0_i32, %c0_i32_0 : i32, i32
  }
  func.func @transform_2(%arg0: i32) -> (i32, i32) {
    %c0_i32 = arith.constant 0 : i32
    %c0_i32_0 = arith.constant 0 : i32
    %c0_i32_1 = arith.constant 0 : i32
    return %c0_i32, %c0_i32_0 : i32, i32
  }
  func.func @transform_3(%arg0: i32) -> (i32, i32) {
    %c0_i32 = arith.constant 0 : i32
    %c0_i32_0 = arith.constant 0 : i32
    %c0_i32_1 = arith.constant 0 : i32
    return %c0_i32, %c0_i32_0 : i32, i32
  }
  func.func @transform_4(%arg0: i32) -> (i32, i32) {
    %c0_i32 = arith.constant 0 : i32
    %c0_i32_0 = arith.constant 0 : i32
    %c0_i32_1 = arith.constant 0 : i32
    return %c0_i32, %c0_i32_0 : i32, i32
  }
  func.func @transform_5(%arg0: i32) -> (i32, i32) {
    %c0_i32 = arith.constant 0 : i32
    %c0_i32_0 = arith.constant 0 : i32
    %c0_i32_1 = arith.constant 0 : i32
    return %c0_i32, %c0_i32_0 : i32, i32
  }
  func.func @transform_6(%arg0: i32) -> (i32, i32) {
    %c0_i32 = arith.constant 0 : i32
    %c0_i32_0 = arith.constant 0 : i32
    %c0_i32_1 = arith.constant 0 : i32
    return %c0_i32, %c0_i32_0 : i32, i32
  }
  func.func @transform_7(%arg0: i32) -> (i32, i32) {
    %c0_i32 = arith.constant 0 : i32
    %c0_i32_0 = arith.constant 0 : i32
    return %arg0, %c0_i32 : i32, i32
  }
}

</mosaic_0001>

<llo_original>
// kernel: tpu_custom_call.1
$region0: #{tpu_custom_call.1}
  #allocation0 [shape = 'u32[]', space=smem, size = 0x4, offset = 0x4, fixed_abs, tag = 'smem constant byte address 0x4 - core index']
  #allocation1 [shape = 'u32[144,128]{1,0:T(1,128)}', space=vmem, size = 0x12000, scoped, tag = 'internal scratch']
  %s0 = inlined_call_operand.vmem [shape: f32[8,32], index: 0, kind: input, shape index: {}]
  %s1 = inlined_call_operand.vmem [shape: f32[64,32], index: 1, kind: input, shape index: {}]
  %s2 = inlined_call_operand.vmem [shape: f32[1,64], index: 2, kind: input, shape index: {}]
  %s3 = inlined_call_operand.vmem [shape: f32[32,64], index: 3, kind: input, shape index: {}]
  %s4 = inlined_call_operand.vmem [shape: f32[1,32], index: 4, kind: input, shape index: {}]
  %s5 = inlined_call_operand.vmem [shape: f32[32,32], index: 5, kind: input, shape index: {}]
  %s6 = inlined_call_operand.vmem [shape: f32[1,32], index: 6, kind: input, shape index: {}]
  %s7 = inlined_call_operand.hbm [shape: f32[8,32], index: 7, kind: output, shape index: {}]
  %s8 = sld [smem:[#allocation0]]
  $region38: #{tpu_custom_call.1} parent=0
    _
  %s10 = ssub.s32 1, %s8
  %s11 = scalar_select 0, %s10, %s8
  $region1: #{tpu_custom_call.1} parent=0
    #allocation2 [shape = 'u8[4096]{0}', space=vmem, size = 0x1000, scoped, tag = 'output window, operand 0, single buffered']
    #allocation3 [shape = 's32[1]{0}', space=sflag, size = 0x4, scoped, tag = 'scoped memory for tpu_custom_call.1']
    %12 = vsyncpa [#allocation3], 0
    // Predicated region
    $region2: #{tpu_custom_call.1} parent=1 // pred_check
      _
    $region3: #{tpu_custom_call.1} parent=1 // pred_check_branch
      %14 = sbr.rel (0) target = $region5
    $region4: #{tpu_custom_call.1} parent=1 // pred_region
      _
    $region5: #{tpu_custom_call.1} parent=1 // pred_fallthru
      _
    // Predicated region
    $region6: #{tpu_custom_call.1} parent=1 // pred_check
      _
    $region7: #{tpu_custom_call.1} parent=1 // pred_check_branch
      %16 = sbr.rel (0) target = $region9
    $region8: #{tpu_custom_call.1} parent=1 // pred_region
      _
    $region9: #{tpu_custom_call.1} parent=1 // pred_fallthru
      _
    // Predicated region
    $region10: #{tpu_custom_call.1} parent=1 // pred_check
      _
    $region11: #{tpu_custom_call.1} parent=1 // pred_check_branch
      %18 = sbr.rel (0) target = $region13
    $region12: #{tpu_custom_call.1} parent=1 // pred_region
      _
    $region13: #{tpu_custom_call.1} parent=1 // pred_fallthru
      _
    // Predicated region
    $region14: #{tpu_custom_call.1} parent=1 // pred_check
      _
    $region15: #{tpu_custom_call.1} parent=1 // pred_check_branch
      %20 = sbr.rel (0) target = $region17
    $region16: #{tpu_custom_call.1} parent=1 // pred_region
      _
    $region17: #{tpu_custom_call.1} parent=1 // pred_fallthru
      _
    // Predicated region
    $region18: #{tpu_custom_call.1} parent=1 // pred_check
      _
    $region19: #{tpu_custom_call.1} parent=1 // pred_check_branch
      %22 = sbr.rel (0) target = $region21
    $region20: #{tpu_custom_call.1} parent=1 // pred_region
      _
    $region21: #{tpu_custom_call.1} parent=1 // pred_fallthru
      _
    // Predicated region
    $region22: #{tpu_custom_call.1} parent=1 // pred_check
      _
    $region23: #{tpu_custom_call.1} parent=1 // pred_check_branch
      %24 = sbr.rel (0) target = $region25
    $region24: #{tpu_custom_call.1} parent=1 // pred_region
      _
    $region25: #{tpu_custom_call.1} parent=1 // pred_fallthru
      _
    // Predicated region
    $region26: #{tpu_custom_call.1} parent=1 // pred_check
      _
    $region27: #{tpu_custom_call.1} parent=1 // pred_check_branch
      %26 = sbr.rel (0) target = $region29
    $region28: #{tpu_custom_call.1} parent=1 // pred_region
      _
    $region29: #{tpu_custom_call.1} parent=1 // pred_fallthru
      _
    %v27 = vld [vmem:[%s0] sm:$0xff]
    %v28 = vld [vmem:[%s1] sm:$0xff]
    %v29 = vld [vmem:[%s1 + $0x8] sm:$0xff]
    %v30 = vld [vmem:[%s1 + $0x10] sm:$0xff]
    %v31 = vld [vmem:[%s1 + $0x18] sm:$0xff]
    %v32 = vld [vmem:[%s1 + $0x20] sm:$0xff]
    %v33 = vld [vmem:[%s1 + $0x28] sm:$0xff]
    %v34 = vld [vmem:[%s1 + $0x30] sm:$0xff]
    %v35 = vld [vmem:[%s1 + $0x38] sm:$0xff]
    %v36 = vld [vmem:[%s2] sm:$0x1]
    %v38 = vlaneseq
    %v39 = vshrl.u32 %v38, 7
    %v40 = vsub.s32 0, %v39
    %v41 = vrot.slane %v36, %v40
    %vm43 = vcmask 261120
    %v45 = vsel %vm43, %v27, 0
    %v48 = vsel %vm43, %v28, 0
    %v51 = vsel %vm43, %v29, 0
    %v54 = vsel %vm43, %v30, 0
    %v57 = vsel %vm43, %v31, 0
    %v60 = vsel %vm43, %v32, 0
    %v63 = vsel %vm43, %v33, 0
    %v66 = vsel %vm43, %v34, 0
    %v69 = vsel %vm43, %v35, 0
    %71 = vmatprep.subr.mxu0 0.0
    %72 = vmatpush1.xpose.msra.mxu0 0.0
    %73 = vmatprep.subr.mxu0 0.0
    %74 = vmatpush1.xpose.msra.mxu0 0.0
    %75 = vmatprep.subr.mxu0 0.0
    %76 = vmatpush1.xpose.msra.mxu0 0.0
    %77 = vmatprep.subr.mxu0 0.0
    %78 = vmatpush1.xpose.msra.mxu0 0.0
    %79 = vmatprep.subr.mxu0 0.0
    %80 = vmatpush1.xpose.msra.mxu0 0.0
    %81 = vmatprep.subr.mxu0 0.0
    %82 = vmatpush1.xpose.msra.mxu0 0.0
    %83 = vmatprep.subr.mxu0 0.0
    %84 = vmatpush1.xpose.msra.mxu0 0.0
    %85 = vmatprep.subr.mxu0 0.0
    %86 = vmatpush1.xpose.msra.mxu0 0.0
    %87 = vmatprep.subr.mxu0 0.0
    %88 = vmatpush1.xpose.msra.mxu0 %v69
    %89 = vmatprep.subr.mxu0 0.0
    %90 = vmatpush1.xpose.msra.mxu0 %v66
    %91 = vmatprep.subr.mxu0 0.0
    %92 = vmatpush1.xpose.msra.mxu0 %v63
    %93 = vmatprep.subr.mxu0 0.0
    %94 = vmatpush1.xpose.msra.mxu0 %v60
    %95 = vmatprep.subr.mxu0 0.0
    %96 = vmatpush1.xpose.msra.mxu0 %v57
    %97 = vmatprep.subr.mxu0 0.0
    %98 = vmatpush1.xpose.msra.mxu0 %v54
    %99 = vmatprep.subr.mxu0 0.0
    %100 = vmatpush1.xpose.msra.mxu0 %v51
    %101 = vmatprep.subr.mxu0 0.0
    %102 = vmatpush1.xpose.msra.mxu0 %v48
    %103 = vmatprep.subr.mxu0 0.0
    %104 = vmatpush2.xpose.msra.mxu0 0.0
    %105 = vmatprep.subr.mxu0 0.0
    %106 = vmatpush2.xpose.msra.mxu0 0.0
    %107 = vmatprep.subr.mxu0 0.0
    %108 = vmatpush2.xpose.msra.mxu0 0.0
    %109 = vmatprep.subr.mxu0 0.0
    %110 = vmatpush2.xpose.msra.mxu0 0.0
    %111 = vmatprep.subr.mxu0 0.0
    %112 = vmatpush2.xpose.msra.mxu0 0.0
    %113 = vmatprep.subr.mxu0 0.0
    %114 = vmatpush2.xpose.msra.mxu0 0.0
    %115 = vmatprep.subr.mxu0 0.0
    %116 = vmatpush2.xpose.msra.mxu0 0.0
    %117 = vmatprep.subr.mxu0 0.0
    %118 = vmatpush2.xpose.msra.mxu0 0.0
    %119 = vmatprep.subr.mxu0 0.0
    %120 = vmatpush2.xpose.msra.mxu0 0.0
    %121 = vmatprep.subr.mxu0 0.0
    %122 = vmatpush2.xpose.msra.mxu0 0.0
    %123 = vmatprep.subr.mxu0 0.0
    %124 = vmatpush2.xpose.msra.mxu0 0.0
    %125 = vmatprep.subr.mxu0 0.0
    %126 = vmatpush2.xpose.msra.mxu0 0.0
    %127 = vmatprep.subr.mxu0 0.0
    %128 = vmatpush2.xpose.msra.mxu0 0.0
    %129 = vmatprep.subr.mxu0 0.0
    %130 = vmatpush2.xpose.msra.mxu0 0.0
    %131 = vmatprep.subr.mxu0 0.0
    %132 = vmatpush2.xpose.msra.mxu0 0.0
    %133 = vmatprep.subr.mxu0 0.0
    %134 = vmatpush2.xpose.msra.mxu0 0.0
    %135 = vmatprep.mubr.f32.mxu0 0.0
    %136 = vmatmul.mubr.f32.gmra.mxu0 %v45
    %v137 = vpop.f32.mrf.mxu0
    %v138 = vadd.f32 %v41, %v137
    %v139 = vpop.f32.mrf.mxu0
    %140 = vdwg.mxu0
    %v141 = vmax.f32 %v138, 0.0
    %v142 = vld [vmem:[%s3] sm:$0xff]
    %v143 = vld [vmem:[%s3 + $0x8] sm:$0xff]
    %v144 = vld [vmem:[%s3 + $0x10] sm:$0xff]
    %v145 = vld [vmem:[%s3 + $0x18] sm:$0xff]
    %v146 = vld [vmem:[%s4] sm:$0x1]
    %v148 = vlaneseq
    %v149 = vshrl.u32 %v148, 7
    %v150 = vsub.s32 0, %v149
    %v151 = vrot.slane %v146, %v150
    %vm153 = vcmask 523264
    %v155 = vsel %vm153, %v141, 0
    %v158 = vsel %vm153, %v142, 0
    %v161 = vsel %vm153, %v143, 0
    %v164 = vsel %vm153, %v144, 0
    %v167 = vsel %vm153, %v145, 0
    %169 = vmatprep.subr.mxu0 0.0
    %170 = vmatpush1.xpose.msra.mxu0 0.0
    %171 = vmatprep.subr.mxu0 0.0
    %172 = vmatpush1.xpose.msra.mxu0 0.0
    %173 = vmatprep.subr.mxu0 0.0
    %174 = vmatpush1.xpose.msra.mxu0 0.0
    %175 = vmatprep.subr.mxu0 0.0
    %176 = vmatpush1.xpose.msra.mxu0 0.0
    %177 = vmatprep.subr.mxu0 0.0
    %178 = vmatpush1.xpose.msra.mxu0 0.0
    %179 = vmatprep.subr.mxu0 0.0
    %180 = vmatpush1.xpose.msra.mxu0 0.0
    %181 = vmatprep.subr.mxu0 0.0
    %182 = vmatpush1.xpose.msra.mxu0 0.0
    %183 = vmatprep.subr.mxu0 0.0
    %184 = vmatpush1.xpose.msra.mxu0 0.0
    %185 = vmatprep.subr.mxu0 0.0
    %186 = vmatpush1.xpose.msra.mxu0 0.0
    %187 = vmatprep.subr.mxu0 0.0
    %188 = vmatpush1.xpose.msra.mxu0 0.0
    %189 = vmatprep.subr.mxu0 0.0
    %190 = vmatpush1.xpose.msra.mxu0 0.0
    %191 = vmatprep.subr.mxu0 0.0
    %192 = vmatpush1.xpose.msra.mxu0 0.0
    %193 = vmatprep.subr.mxu0 0.0
    %194 = vmatpush1.xpose.msra.mxu0 %v167
    %195 = vmatprep.subr.mxu0 0.0
    %196 = vmatpush1.xpose.msra.mxu0 %v164
    %197 = vmatprep.subr.mxu0 0.0
    %198 = vmatpush1.xpose.msra.mxu0 %v161
    %199 = vmatprep.subr.mxu0 0.0
    %200 = vmatpush1.xpose.msra.mxu0 %v158
    %201 = vmatprep.subr.mxu0 0.0
    %202 = vmatpush2.xpose.msra.mxu0 0.0
    %203 = vmatprep.subr.mxu0 0.0
    %204 = vmatpush2.xpose.msra.mxu0 0.0
    %205 = vmatprep.subr.mxu0 0.0
    %206 = vmatpush2.xpose.msra.mxu0 0.0
    %207 = vmatprep.subr.mxu0 0.0
    %208 = vmatpush2.xpose.msra.mxu0 0.0
    %209 = vmatprep.subr.mxu0 0.0
    %210 = vmatpush2.xpose.msra.mxu0 0.0
    %211 = vmatprep.subr.mxu0 0.0
    %212 = vmatpush2.xpose.msra.mxu0 0.0
    %213 = vmatprep.subr.mxu0 0.0
    %214 = vmatpush2.xpose.msra.mxu0 0.0
    %215 = vmatprep.subr.mxu0 0.0
    %216 = vmatpush2.xpose.msra.mxu0 0.0
    %217 = vmatprep.subr.mxu0 0.0
    %218 = vmatpush2.xpose.msra.mxu0 0.0
    %219 = vmatprep.subr.mxu0 0.0
    %220 = vmatpush2.xpose.msra.mxu0 0.0
    %221 = vmatprep.subr.mxu0 0.0
    %222 = vmatpush2.xpose.msra.mxu0 0.0
    %223 = vmatprep.subr.mxu0 0.0
    %224 = vmatpush2.xpose.msra.mxu0 0.0
    %225 = vmatprep.subr.mxu0 0.0
    %226 = vmatpush2.xpose.msra.mxu0 0.0
    %227 = vmatprep.subr.mxu0 0.0
    %228 = vmatpush2.xpose.msra.mxu0 0.0
    %229 = vmatprep.subr.mxu0 0.0
    %230 = vmatpush2.xpose.msra.mxu0 0.0
    %231 = vmatprep.subr.mxu0 0.0
    %232 = vmatpush2.xpose.msra.mxu0 0.0
    %233 = vmatprep.mubr.f32.mxu0 0.0
    %234 = vmatmul.mubr.f32.gmra.mxu0 %v155
    %v235 = vpop.f32.mrf.mxu0
    %v236 = vadd.f32 %v151, %v235
    %v237 = vpop.f32.mrf.mxu0
    %238 = vdwg.mxu0
    %v239 = vmax.f32 %v236, 0.0
    %v240 = vld [vmem:[%s5] sm:$0xff]
    %v241 = vld [vmem:[%s5 + $0x8] sm:$0xff]
    %v242 = vld [vmem:[%s5 + $0x10] sm:$0xff]
    %v243 = vld [vmem:[%s5 + $0x18] sm:$0xff]
    %v244 = vld [vmem:[%s6] sm:$0x1]
    %v246 = vlaneseq
    %v247 = vshrl.u32 %v246, 7
    %v248 = vsub.s32 0, %v247
    %v249 = vrot.slane %v244, %v248
    %v252 = vsel %vm43, %v239, 0
    %v255 = vsel %vm43, %v240, 0
    %v258 = vsel %vm43, %v241, 0
    %v261 = vsel %vm43, %v242, 0
    %v264 = vsel %vm43, %v243, 0
    %266 = vmatprep.subr.mxu0 0.0
    %267 = vmatpush1.xpose.msra.mxu0 0.0
    %268 = vmatprep.subr.mxu0 0.0
    %269 = vmatpush1.xpose.msra.mxu0 0.0
    %270 = vmatprep.subr.mxu0 0.0
    %271 = vmatpush1.xpose.msra.mxu0 0.0
    %272 = vmatprep.subr.mxu0 0.0
    %273 = vmatpush1.xpose.msra.mxu0 0.0
    %274 = vmatprep.subr.mxu0 0.0
    %275 = vmatpush1.xpose.msra.mxu0 0.0
    %276 = vmatprep.subr.mxu0 0.0
    %277 = vmatpush1.xpose.msra.mxu0 0.0
    %278 = vmatprep.subr.mxu0 0.0
    %279 = vmatpush1.xpose.msra.mxu0 0.0
    %280 = vmatprep.subr.mxu0 0.0
    %281 = vmatpush1.xpose.msra.mxu0 0.0
    %282 = vmatprep.subr.mxu0 0.0
    %283 = vmatpush1.xpose.msra.mxu0 0.0
    %284 = vmatprep.subr.mxu0 0.0
    %285 = vmatpush1.xpose.msra.mxu0 0.0
    %286 = vmatprep.subr.mxu0 0.0
    %287 = vmatpush1.xpose.msra.mxu0 0.0
    %288 = vmatprep.subr.mxu0 0.0
    %289 = vmatpush1.xpose.msra.mxu0 0.0
    %290 = vmatprep.subr.mxu0 0.0
    %291 = vmatpush1.xpose.msra.mxu0 %v264
    %292 = vmatprep.subr.mxu0 0.0
    %293 = vmatpush1.xpose.msra.mxu0 %v261
    %294 = vmatprep.subr.mxu0 0.0
    %295 = vmatpush1.xpose.msra.mxu0 %v258
    %296 = vmatprep.subr.mxu0 0.0
    %297 = vmatpush1.xpose.msra.mxu0 %v255
    %298 = vmatprep.subr.mxu0 0.0
    %299 = vmatpush2.xpose.msra.mxu0 0.0
    %300 = vmatprep.subr.mxu0 0.0
    %301 = vmatpush2.xpose.msra.mxu0 0.0
    %302 = vmatprep.subr.mxu0 0.0
    %303 = vmatpush2.xpose.msra.mxu0 0.0
    %304 = vmatprep.subr.mxu0 0.0
    %305 = vmatpush2.xpose.msra.mxu0 0.0
    %306 = vmatprep.subr.mxu0 0.0
    %307 = vmatpush2.xpose.msra.mxu0 0.0
    %308 = vmatprep.subr.mxu0 0.0
    %309 = vmatpush2.xpose.msra.mxu0 0.0
    %310 = vmatprep.subr.mxu0 0.0
    %311 = vmatpush2.xpose.msra.mxu0 0.0
    %312 = vmatprep.subr.mxu0 0.0
    %313 = vmatpush2.xpose.msra.mxu0 0.0
    %314 = vmatprep.subr.mxu0 0.0
    %315 = vmatpush2.xpose.msra.mxu0 0.0
    %316 = vmatprep.subr.mxu0 0.0
    %317 = vmatpush2.xpose.msra.mxu0 0.0
    %318 = vmatprep.subr.mxu0 0.0
    %319 = vmatpush2.xpose.msra.mxu0 0.0
    %320 = vmatprep.subr.mxu0 0.0
    %321 = vmatpush2.xpose.msra.mxu0 0.0
    %322 = vmatprep.subr.mxu0 0.0
    %323 = vmatpush2.xpose.msra.mxu0 0.0
    %324 = vmatprep.subr.mxu0 0.0
    %325 = vmatpush2.xpose.msra.mxu0 0.0
    %326 = vmatprep.subr.mxu0 0.0
    %327 = vmatpush2.xpose.msra.mxu0 0.0
    %328 = vmatprep.subr.mxu0 0.0
    %329 = vmatpush2.xpose.msra.mxu0 0.0
    %330 = vmatprep.mubr.f32.mxu0 0.0
    %331 = vmatmul.mubr.f32.gmra.mxu0 %v252
    %v332 = vpop.f32.mrf.mxu0
    %v333 = vadd.f32 %v249, %v332
    %v334 = vpop.f32.mrf.mxu0
    %335 = vdwg.mxu0
    %v336 = vmax.f32 %v333, 0.0
    %v337 = vand.u32 2147483647, %v333
    %v338 = vsub.f32 0.0, %v337
    %v339 = vmul.f32 %v338, 1.442695
    %v340 = vpow.pop %v339
    %v341 = vadd.f32 %v340, 1.0
    %v342 = vlog2.pop %v341
    %v343 = vmul.f32 %v342, 0.6931472
    %v344 = vmul.f32 -0.5, %v340
    %v345 = vadd.f32 %v344, 1.0
    %v346 = vmul.f32 %v345, %v340
    %v347 = vand.u32 2147483647, %v340
    %vm348 = vcmp.lt.f32.partialorder %v347, 0.0004427343
    %v349 = vsel %vm348, %v346, %v343
    %v350 = vadd.f32 %v336, %v349
    %v351 = vlaneseq
    %v352 = vand.u32 %v351, 127
    %vm353 = vcmp.lt.s32.totalorder %v352, 16
    %v354 = vsel %vm353, %v333, %v350
    %355 = vst.msk [vmem:[#allocation2] sm:$0xff] %vm43, %v354
    // Predicated region
    $region30: #{tpu_custom_call.1} parent=1 // pred_check
      _
    $region31: #{tpu_custom_call.1} parent=1 // pred_check_branch
      %357 = sbr.rel (0) target = $region33
    $region32: #{tpu_custom_call.1} parent=1 // pred_region
      %s359 = ssub.s32 128, 128
      %360 = vsyncadd [#allocation3], %s359
      %s362 = sshll.u32 [#allocation2], 4
      %s363 = int_to_ptr.vmem [resolvable:$true] %s362
      %365 = dma.vmem_to_hbm [thread:$0]  %s363, 128, %s7, [#allocation3]
    $region33: #{tpu_custom_call.1} parent=1 // pred_fallthru
      _
    // Predicated region
    $region34: #{tpu_custom_call.1} parent=1 // pred_check
      _
    $region35: #{tpu_custom_call.1} parent=1 // pred_check_branch
      %367 = sbr.rel (0) target = $region37
    $region36: #{tpu_custom_call.1} parent=1 // pred_region
      %368 = dma.done [#allocation3], 128
    $region37: #{tpu_custom_call.1} parent=1 // pred_fallthru
      _
    %369 = vsyncpa [#allocation3], 1

</llo_original>
